<compile_context>
chip_gen: v7x
topology: tpu7x:2x2x1
jax: 0.10.0
libtpu: 0.0.40
codegen_flags: <defaults>
</compile_context>

<pallas_src>
import math
from functools import partial

import numpy as np
import jax
import jax.numpy as jnp
from jax.experimental import pallas as pl
from jax.experimental.pallas import tpu as pltpu


def cosine_beta_schedule(timesteps, s=0.008):
    steps = timesteps + 1
    x = np.linspace(0, steps, steps)
    alphas_cumprod = np.cos((x / steps + s) / (1 + s) * np.pi * 0.5) ** 2
    alphas_cumprod = alphas_cumprod / alphas_cumprod[0]
    betas = 1 - alphas_cumprod[1:] / alphas_cumprod[:-1]
    return np.clip(betas, a_min=0, a_max=0.999)


def _diffusion_loss_kernel(coefs_ref,   # SMEM (B*(2+C),): [sa, soma, bias_j+temb_j ...] per batch elem
                           wc_ref,      # SMEM (Cc*C,) flattened w_cond, row-major [k, j]
                           wx_ref,      # SMEM (C*C,)  flattened w_x,    row-major [k, j]
                           x_ref,       # VMEM (tb, C,  s_chunk, 128)
                           cond_ref,    # VMEM (tb, Cc, s_chunk, 128)
                           noise_ref,   # VMEM (tb, C,  s_chunk, 128)
                           out_ref,     # VMEM (1, 1, s_chunk, 128) lane-dense partial |err| sums
                           *, tb, c, cc, s_chunk):
    blk = pl.program_id(0)
    stride = 2 + c

    # Hoist the (Cc + C) * C weight scalar reads out of the per-batch unroll
    # (they are invariant across bi and across the grid).
    wc = [wc_ref[i] for i in range(cc * c)]
    wx = [wx_ref[i] for i in range(c * c)]

    # Dense (sublane, lane) accumulator; summed in plain JAX afterwards.
    acc = jnp.zeros((s_chunk, 128), jnp.float32)

    for bi in range(tb):                                   # static unroll, tb <= 8
        base = (blk * tb + bi) * stride
        sa = coefs_ref[base + 0]                           # sqrt(alphas_cumprod[t_b])
        soma = coefs_ref[base + 1]                         # sqrt(1 - alphas_cumprod[t_b])

        x_b = x_ref[bi].astype(jnp.float32)                # (C,  s_chunk, 128)
        n_b = noise_ref[bi].astype(jnp.float32)            # (C,  s_chunk, 128)
        c_b = cond_ref[bi].astype(jnp.float32)             # (Cc, s_chunk, 128)

        # q_sample: x_noisy = sqrt(acp_t) * x_start + sqrt(1 - acp_t) * noise  (pure VPU)
        x_noisy = sa * x_b + soma * n_b                    # (C, s_chunk, 128)

        # denoise_fn (synthetic): 1x1 conv over concat([cond, x_noisy], channel)
        # unrolled as sublane-dense VPU broadcast-FMAs (K = Cc + C = 8: too small for MXU).
        for j in range(c):
            rec = coefs_ref[base + 2 + j]                  # bias_j + temb[t_b, j] (pre-folded)
            for k in range(cc):
                rec = rec + wc[k * c + j] * c_b[k]         # (s_chunk, 128)
            for k in range(c):
                rec = rec + wx[k * c + j] * x_noisy[k]
            acc = acc + jnp.abs(n_b[j] - rec)              # L1 contribution

    out_ref[...] = acc[None, None, :, :]                   # unmasked lane-dense store


def _pick_hw_chunk(s, max_sublanes=16):
    """Sublane rows (each 128 lanes) of the spatial axis per grid step.

    Either the whole extent (small images) or a multiple of 8 dividing `s`
    (keeps the (8,128) BlockSpec constraint) capped to bound live vregs.
    """
    if s <= max_sublanes:
        return s
    cand = (max_sublanes // 8) * 8
    while cand >= 8:
        if s % cand == 0:
            return cand
        cand -= 8
    return s   # fall back: full spatial extent per step (block == full dims)


def _pick_batch_block(b, per_elem_bytes, *, budget_bytes=1 << 20, max_unroll=8,
                      prefer_split=True):
    """Largest divisor of b (<= max_unroll) whose per-step input bytes fit the
    budget; when prefer_split, keep >= 2 grid blocks so v7x's 2 TCs both work."""
    best = 1
    for tb in range(2, min(b, max_unroll) + 1):
        if b % tb:
            continue
        if tb * per_elem_bytes > budget_bytes:
            continue
        if prefer_split and b // tb < 2:
            continue
        best = tb
    return best


class GaussianDiffusionPallas:
    def __init__(self, image_size, x_channels=4, cond_channels=4,
                 timesteps=100, loss_type="l1"):
        assert loss_type == "l1"
        self.image_size = image_size
        self.x_channels = x_channels
        self.cond_channels = cond_channels
        self.num_timesteps = int(timesteps)

        betas = cosine_beta_schedule(timesteps)
        alphas = 1.0 - betas
        alphas_cumprod = np.cumprod(alphas, axis=0)
        self.sqrt_alphas_cumprod = jnp.asarray(np.sqrt(alphas_cumprod), jnp.float32)
        self.sqrt_one_minus_alphas_cumprod = jnp.asarray(
            np.sqrt(1.0 - alphas_cumprod), jnp.float32)

        # Deterministic synthetic denoise_fn parameters.
        kw = jax.random.PRNGKey(42)
        k1, k2, k3, k4 = jax.random.split(kw, 4)
        cin_cond, c = cond_channels, x_channels
        self.w_cond = (jax.random.normal(k1, (cin_cond, c), jnp.float32)
                       / math.sqrt(cin_cond + c))
        self.w_x = (jax.random.normal(k2, (c, c), jnp.float32)
                    / math.sqrt(cin_cond + c))
        self.bias = 0.01 * jax.random.normal(k3, (1, c), jnp.float32)
        self.temb_table = 0.1 * jax.random.normal(k4, (timesteps, c), jnp.float32)

        # Flat 1-D copies for SMEM (1-D SMEM pads tightly; 2-D pads to (8,128) words).
        self.w_cond_flat = self.w_cond.reshape(-1)
        self.w_x_flat = self.w_x.reshape(-1)

    def forward(self, x, x_condition, key, input_dtype=jnp.float32):
        """x, x_condition: NCHW float32.  Returns (scalar L1 diffusion loss, t, noise).

        input_dtype=jnp.bfloat16 halves HBM traffic (recommended on HBM-bound
        v5e); accumulation stays in f32 either way (relax tolerance vs f32 ref).
        """
        B, C, H, W = x.shape
        Cc = x_condition.shape[1]
        assert H == self.image_size and W == self.image_size
        HW = H * W
        assert HW % 128 == 0, "image_size**2 must be a multiple of the 128-lane width"
        S = HW // 128                                        # sublane rows of 128 lanes

        t_key, n_key = jax.random.split(key)
        t = jax.random.randint(t_key, (B,), 0, self.num_timesteps, dtype=jnp.int32)
        noise = jax.random.normal(n_key, x.shape, dtype=jnp.float32)

        # extract(...) gathers + time-embedding lookup (glue, plain JAX).  bias + temb
        # are pre-folded so the kernel reads a single scalar per output channel:
        #   coefs per batch elem = [sa, soma, bias_0+temb_0, ..., bias_{C-1}+temb_{C-1}]
        sa = self.sqrt_alphas_cumprod[t]
        soma = self.sqrt_one_minus_alphas_cumprod[t]
        bt = self.bias.reshape(1, C) + self.temb_table[t]                # (B, C)
        coefs = jnp.concatenate([sa[:, None], soma[:, None], bt], axis=1)
        coefs = coefs.reshape(-1).astype(jnp.float32)                    # (B*(2+C),)

        # Free reshape (HW contiguous): channels stay on the leading axis, the
        # spatial axis is sublane-packed as (S, 128) so every VPU op is dense.
        x_r = x.reshape(B, C, S, 128).astype(input_dtype)
        cond_r = x_condition.reshape(B, Cc, S, 128).astype(input_dtype)
        noise_r = noise.reshape(B, C, S, 128).astype(input_dtype)

        itemsize = jnp.dtype(input_dtype).itemsize
        s_chunk = _pick_hw_chunk(S)                          # bounds live vregs per step
        n_hw = S // s_chunk
        per_elem_bytes = (2 * C + Cc) * s_chunk * 128 * itemsize
        tb = _pick_batch_block(B, per_elem_bytes, prefer_split=(n_hw < 2))
        nb = B // tb

        # Generation-aware VMEM budget: double-buffered inputs + output, with slack.
        per_step_bytes = tb * per_elem_bytes + s_chunk * 128 * 4
        vmem_limit = int(min(max(4 * per_step_bytes, 8 << 20), 32 << 20))

        kernel = partial(_diffusion_loss_kernel, tb=tb, c=C, cc=Cc, s_chunk=s_chunk)

        grid_spec = pl.GridSpec(
            grid=(nb, n_hw),
            in_specs=[
                pl.BlockSpec(memory_space=pltpu.MemorySpace.SMEM),       # coefs (flat)
                pl.BlockSpec(memory_space=pltpu.MemorySpace.SMEM),       # w_cond (flat)
                pl.BlockSpec(memory_space=pltpu.MemorySpace.SMEM),       # w_x (flat)
                pl.BlockSpec((tb, C, s_chunk, 128), lambda i, j: (i, 0, j, 0)),   # x
                pl.BlockSpec((tb, Cc, s_chunk, 128), lambda i, j: (i, 0, j, 0)),  # condition
                pl.BlockSpec((tb, C, s_chunk, 128), lambda i, j: (i, 0, j, 0)),   # noise
            ],
            out_specs=pl.BlockSpec((1, 1, s_chunk, 128),
                                   lambda i, j: (i, j, 0, 0)),           # per-block partials
        )

        partials = pl.pallas_call(
            kernel,
            out_shape=jax.ShapeDtypeStruct((nb, n_hw, s_chunk, 128), jnp.float32),
            grid_spec=grid_spec,
            compiler_params=pltpu.CompilerParams(
                # Every (batch-block, hw-chunk) step is independent -> both axes
                # parallel (shards across v7x's two TensorCores).
                dimension_semantics=("parallel", "parallel"),
                vmem_limit_bytes=vmem_limit),
        )(coefs, self.w_cond_flat, self.w_x_flat, x_r, cond_r, noise_r)

        loss = jnp.sum(partials) / float(B * C * HW)
        return loss, t, noise

    # Pure-JAX reference of the same forward semantics (for checking).
    def reference(self, x, x_condition, t, noise):
        B, C, H, W = x.shape
        sa = self.sqrt_alphas_cumprod[t].reshape(B, 1, 1, 1)
        soma = self.sqrt_one_minus_alphas_cumprod[t].reshape(B, 1, 1, 1)
        x_noisy = sa * x + soma * noise
        inp = jnp.concatenate([x_condition, x_noisy], axis=1)            # (B, Cc+C, H, W)
        w_full = jnp.concatenate([self.w_cond, self.w_x], axis=0)        # (Cc+C, C)
        x_recon = (jnp.einsum("bchw,cd->bdhw", inp, w_full,
                              precision=jax.lax.Precision.HIGHEST)
                   + self.bias.reshape(1, C, 1, 1)
                   + self.temb_table[t].reshape(B, C, 1, 1))
        return jnp.mean(jnp.abs(noise - x_recon))


if __name__ == "__main__":
    B, C, Cc, H = 2, 4, 4, 16
    model = GaussianDiffusionPallas(image_size=H, x_channels=C,
                                    cond_channels=Cc, timesteps=100)

    key = jax.random.PRNGKey(0)
    kx, kc, kfwd = jax.random.split(key, 3)
    x = jax.random.normal(kx, (B, C, H, H), dtype=jnp.float32)
    x_condition = jax.random.normal(kc, (B, Cc, H, H), dtype=jnp.float32)

    loss, t, noise = model.forward(x, x_condition, kfwd)
    loss = jax.block_until_ready(loss)

    ref = jax.block_until_ready(model.reference(x, x_condition, t, noise))
    assert np.allclose(np.asarray(loss), np.asarray(ref), rtol=1e-4, atol=1e-4), \
        (loss, ref)

    # TODO(synk): MS_SSIM / VGGPerceptualLoss are constructed in __init__ but
    # never used in forward(); they are intentionally omitted.
    print("KERNEL_OK")
</pallas_src>

<mosaic_0001>
module attributes {stable_mosaic.version = 11 : i64} {
  func.func @_diffusion_loss_kernel(%arg0: i32, %arg1: i32, %arg2: memref<12xf32, #tpu.memory_space<smem>>, %arg3: memref<16xf32, #tpu.memory_space<smem>>, %arg4: memref<16xf32, #tpu.memory_space<smem>>, %arg5: memref<1x4x2x128xf32, #tpu.memory_space<vmem>>, %arg6: memref<1x4x2x128xf32, #tpu.memory_space<vmem>>, %arg7: memref<1x4x2x128xf32, #tpu.memory_space<vmem>>, %arg8: memref<1x1x2x128xf32, #tpu.memory_space<vmem>>) attributes {dimension_semantics = [#tpu.dimension_semantics<parallel>, #tpu.dimension_semantics<parallel>], iteration_bounds = array<i64: 2, 1>, scalar_prefetch = 0 : i64, scratch_operands = 0 : i64, tpu.core_type = #tpu.core_type<tc>, window_params = [{transform_indices = @transform_0, window_bounds = array<i64: 12>}, {transform_indices = @transform_1, window_bounds = array<i64: 16>}, {transform_indices = @transform_2, window_bounds = array<i64: 16>}, {transform_indices = @transform_3, window_bounds = array<i64: 1, 4, 2, 128>}, {transform_indices = @transform_4, window_bounds = array<i64: 1, 4, 2, 128>}, {transform_indices = @transform_5, window_bounds = array<i64: 1, 4, 2, 128>}, {transform_indices = @transform_6, window_bounds = array<i64: 1, 1, 2, 128>}]} {
    %c0 = arith.constant 0 : index
    %0 = memref.load %arg3[%c0] : memref<16xf32, #tpu.memory_space<smem>>
    %c1 = arith.constant 1 : index
    %1 = memref.load %arg3[%c1] : memref<16xf32, #tpu.memory_space<smem>>
    %c2 = arith.constant 2 : index
    %2 = memref.load %arg3[%c2] : memref<16xf32, #tpu.memory_space<smem>>
    %c3 = arith.constant 3 : index
    %3 = memref.load %arg3[%c3] : memref<16xf32, #tpu.memory_space<smem>>
    %c4 = arith.constant 4 : index
    %4 = memref.load %arg3[%c4] : memref<16xf32, #tpu.memory_space<smem>>
    %c5 = arith.constant 5 : index
    %5 = memref.load %arg3[%c5] : memref<16xf32, #tpu.memory_space<smem>>
    %c6 = arith.constant 6 : index
    %6 = memref.load %arg3[%c6] : memref<16xf32, #tpu.memory_space<smem>>
    %c7 = arith.constant 7 : index
    %7 = memref.load %arg3[%c7] : memref<16xf32, #tpu.memory_space<smem>>
    %c8 = arith.constant 8 : index
    %8 = memref.load %arg3[%c8] : memref<16xf32, #tpu.memory_space<smem>>
    %c9 = arith.constant 9 : index
    %9 = memref.load %arg3[%c9] : memref<16xf32, #tpu.memory_space<smem>>
    %c10 = arith.constant 10 : index
    %10 = memref.load %arg3[%c10] : memref<16xf32, #tpu.memory_space<smem>>
    %c11 = arith.constant 11 : index
    %11 = memref.load %arg3[%c11] : memref<16xf32, #tpu.memory_space<smem>>
    %c12 = arith.constant 12 : index
    %12 = memref.load %arg3[%c12] : memref<16xf32, #tpu.memory_space<smem>>
    %c13 = arith.constant 13 : index
    %13 = memref.load %arg3[%c13] : memref<16xf32, #tpu.memory_space<smem>>
    %c14 = arith.constant 14 : index
    %14 = memref.load %arg3[%c14] : memref<16xf32, #tpu.memory_space<smem>>
    %c15 = arith.constant 15 : index
    %15 = memref.load %arg3[%c15] : memref<16xf32, #tpu.memory_space<smem>>
    %c0_0 = arith.constant 0 : index
    %16 = memref.load %arg4[%c0_0] : memref<16xf32, #tpu.memory_space<smem>>
    %c1_1 = arith.constant 1 : index
    %17 = memref.load %arg4[%c1_1] : memref<16xf32, #tpu.memory_space<smem>>
    %c2_2 = arith.constant 2 : index
    %18 = memref.load %arg4[%c2_2] : memref<16xf32, #tpu.memory_space<smem>>
    %c3_3 = arith.constant 3 : index
    %19 = memref.load %arg4[%c3_3] : memref<16xf32, #tpu.memory_space<smem>>
    %c4_4 = arith.constant 4 : index
    %20 = memref.load %arg4[%c4_4] : memref<16xf32, #tpu.memory_space<smem>>
    %c5_5 = arith.constant 5 : index
    %21 = memref.load %arg4[%c5_5] : memref<16xf32, #tpu.memory_space<smem>>
    %c6_6 = arith.constant 6 : index
    %22 = memref.load %arg4[%c6_6] : memref<16xf32, #tpu.memory_space<smem>>
    %c7_7 = arith.constant 7 : index
    %23 = memref.load %arg4[%c7_7] : memref<16xf32, #tpu.memory_space<smem>>
    %c8_8 = arith.constant 8 : index
    %24 = memref.load %arg4[%c8_8] : memref<16xf32, #tpu.memory_space<smem>>
    %c9_9 = arith.constant 9 : index
    %25 = memref.load %arg4[%c9_9] : memref<16xf32, #tpu.memory_space<smem>>
    %c10_10 = arith.constant 10 : index
    %26 = memref.load %arg4[%c10_10] : memref<16xf32, #tpu.memory_space<smem>>
    %c11_11 = arith.constant 11 : index
    %27 = memref.load %arg4[%c11_11] : memref<16xf32, #tpu.memory_space<smem>>
    %c12_12 = arith.constant 12 : index
    %28 = memref.load %arg4[%c12_12] : memref<16xf32, #tpu.memory_space<smem>>
    %c13_13 = arith.constant 13 : index
    %29 = memref.load %arg4[%c13_13] : memref<16xf32, #tpu.memory_space<smem>>
    %c14_14 = arith.constant 14 : index
    %30 = memref.load %arg4[%c14_14] : memref<16xf32, #tpu.memory_space<smem>>
    %c15_15 = arith.constant 15 : index
    %31 = memref.load %arg4[%c15_15] : memref<16xf32, #tpu.memory_space<smem>>
    %cst = arith.constant 0.000000e+00 : f32
    %32 = vector.broadcast %cst : f32 to vector<2x128xf32>
    %c1_i32 = arith.constant 1 : i32
    %33 = arith.muli %arg0, %c1_i32 : i32
    %c0_i32 = arith.constant 0 : i32
    %34 = arith.addi %33, %c0_i32 : i32
    %c6_i32 = arith.constant 6 : i32
    %35 = arith.muli %34, %c6_i32 : i32
    %c0_i32_16 = arith.constant 0 : i32
    %36 = arith.addi %35, %c0_i32_16 : i32
    %37 = arith.index_cast %36 : i32 to index
    %38 = memref.load %arg2[%37] : memref<12xf32, #tpu.memory_space<smem>>
    %c1_i32_17 = arith.constant 1 : i32
    %39 = arith.addi %35, %c1_i32_17 : i32
    %40 = arith.index_cast %39 : i32 to index
    %41 = memref.load %arg2[%40] : memref<12xf32, #tpu.memory_space<smem>>
    %c0_18 = arith.constant 0 : index
    %c0_19 = arith.constant 0 : index
    %c0_20 = arith.constant 0 : index
    %c0_21 = arith.constant 0 : index
    %42 = vector.load %arg5[%c0_18, %c0_19, %c0_20, %c0_21] : memref<1x4x2x128xf32, #tpu.memory_space<vmem>>, vector<1x4x2x128xf32>
    %43 = vector.shape_cast %42 : vector<1x4x2x128xf32> to vector<4x2x128xf32>
    %c0_22 = arith.constant 0 : index
    %c0_23 = arith.constant 0 : index
    %c0_24 = arith.constant 0 : index
    %c0_25 = arith.constant 0 : index
    %44 = vector.load %arg7[%c0_22, %c0_23, %c0_24, %c0_25] : memref<1x4x2x128xf32, #tpu.memory_space<vmem>>, vector<1x4x2x128xf32>
    %45 = vector.shape_cast %44 : vector<1x4x2x128xf32> to vector<4x2x128xf32>
    %c0_26 = arith.constant 0 : index
    %c0_27 = arith.constant 0 : index
    %c0_28 = arith.constant 0 : index
    %c0_29 = arith.constant 0 : index
    %46 = vector.load %arg6[%c0_26, %c0_27, %c0_28, %c0_29] : memref<1x4x2x128xf32, #tpu.memory_space<vmem>>, vector<1x4x2x128xf32>
    %47 = vector.shape_cast %46 : vector<1x4x2x128xf32> to vector<4x2x128xf32>
    %48 = vector.broadcast %38 : f32 to vector<4x2x128xf32>
    %49 = arith.mulf %48, %43 : vector<4x2x128xf32>
    %50 = vector.broadcast %41 : f32 to vector<4x2x128xf32>
    %51 = arith.mulf %50, %45 : vector<4x2x128xf32>
    %52 = arith.addf %49, %51 : vector<4x2x128xf32>
    %c2_i32 = arith.constant 2 : i32
    %53 = arith.addi %35, %c2_i32 : i32
    %c0_i32_30 = arith.constant 0 : i32
    %54 = arith.addi %53, %c0_i32_30 : i32
    %55 = arith.index_cast %54 : i32 to index
    %56 = memref.load %arg2[%55] : memref<12xf32, #tpu.memory_space<smem>>
    %57 = vector.extract_strided_slice %47 {offsets = [0, 0, 0], sizes = [1, 2, 128], strides = [1, 1, 1]} : vector<4x2x128xf32> to vector<1x2x128xf32>
    %58 = vector.shape_cast %57 : vector<1x2x128xf32> to vector<2x128xf32>
    %59 = vector.broadcast %0 : f32 to vector<2x128xf32>
    %60 = arith.mulf %59, %58 : vector<2x128xf32>
    %61 = vector.broadcast %56 : f32 to vector<2x128xf32>
    %62 = arith.addf %61, %60 : vector<2x128xf32>
    %63 = vector.extract_strided_slice %47 {offsets = [1, 0, 0], sizes = [1, 2, 128], strides = [1, 1, 1]} : vector<4x2x128xf32> to vector<1x2x128xf32>
    %64 = vector.shape_cast %63 : vector<1x2x128xf32> to vector<2x128xf32>
    %65 = vector.broadcast %4 : f32 to vector<2x128xf32>
    %66 = arith.mulf %65, %64 : vector<2x128xf32>
    %67 = arith.addf %62, %66 : vector<2x128xf32>
    %68 = vector.extract_strided_slice %47 {offsets = [2, 0, 0], sizes = [1, 2, 128], strides = [1, 1, 1]} : vector<4x2x128xf32> to vector<1x2x128xf32>
    %69 = vector.shape_cast %68 : vector<1x2x128xf32> to vector<2x128xf32>
    %70 = vector.broadcast %8 : f32 to vector<2x128xf32>
    %71 = arith.mulf %70, %69 : vector<2x128xf32>
    %72 = arith.addf %67, %71 : vector<2x128xf32>
    %73 = vector.extract_strided_slice %47 {offsets = [3, 0, 0], sizes = [1, 2, 128], strides = [1, 1, 1]} : vector<4x2x128xf32> to vector<1x2x128xf32>
    %74 = vector.shape_cast %73 : vector<1x2x128xf32> to vector<2x128xf32>
    %75 = vector.broadcast %12 : f32 to vector<2x128xf32>
    %76 = arith.mulf %75, %74 : vector<2x128xf32>
    %77 = arith.addf %72, %76 : vector<2x128xf32>
    %78 = vector.extract_strided_slice %52 {offsets = [0, 0, 0], sizes = [1, 2, 128], strides = [1, 1, 1]} : vector<4x2x128xf32> to vector<1x2x128xf32>
    %79 = vector.shape_cast %78 : vector<1x2x128xf32> to vector<2x128xf32>
    %80 = vector.broadcast %16 : f32 to vector<2x128xf32>
    %81 = arith.mulf %80, %79 : vector<2x128xf32>
    %82 = arith.addf %77, %81 : vector<2x128xf32>
    %83 = vector.extract_strided_slice %52 {offsets = [1, 0, 0], sizes = [1, 2, 128], strides = [1, 1, 1]} : vector<4x2x128xf32> to vector<1x2x128xf32>
    %84 = vector.shape_cast %83 : vector<1x2x128xf32> to vector<2x128xf32>
    %85 = vector.broadcast %20 : f32 to vector<2x128xf32>
    %86 = arith.mulf %85, %84 : vector<2x128xf32>
    %87 = arith.addf %82, %86 : vector<2x128xf32>
    %88 = vector.extract_strided_slice %52 {offsets = [2, 0, 0], sizes = [1, 2, 128], strides = [1, 1, 1]} : vector<4x2x128xf32> to vector<1x2x128xf32>
    %89 = vector.shape_cast %88 : vector<1x2x128xf32> to vector<2x128xf32>
    %90 = vector.broadcast %24 : f32 to vector<2x128xf32>
    %91 = arith.mulf %90, %89 : vector<2x128xf32>
    %92 = arith.addf %87, %91 : vector<2x128xf32>
    %93 = vector.extract_strided_slice %52 {offsets = [3, 0, 0], sizes = [1, 2, 128], strides = [1, 1, 1]} : vector<4x2x128xf32> to vector<1x2x128xf32>
    %94 = vector.shape_cast %93 : vector<1x2x128xf32> to vector<2x128xf32>
    %95 = vector.broadcast %28 : f32 to vector<2x128xf32>
    %96 = arith.mulf %95, %94 : vector<2x128xf32>
    %97 = arith.addf %92, %96 : vector<2x128xf32>
    %98 = vector.extract_strided_slice %45 {offsets = [0, 0, 0], sizes = [1, 2, 128], strides = [1, 1, 1]} : vector<4x2x128xf32> to vector<1x2x128xf32>
    %99 = vector.shape_cast %98 : vector<1x2x128xf32> to vector<2x128xf32>
    %100 = arith.subf %99, %97 : vector<2x128xf32>
    %101 = math.absf %100 : vector<2x128xf32>
    %102 = arith.addf %32, %101 : vector<2x128xf32>
    %c2_i32_31 = arith.constant 2 : i32
    %103 = arith.addi %35, %c2_i32_31 : i32
    %c1_i32_32 = arith.constant 1 : i32
    %104 = arith.addi %103, %c1_i32_32 : i32
    %105 = arith.index_cast %104 : i32 to index
    %106 = memref.load %arg2[%105] : memref<12xf32, #tpu.memory_space<smem>>
    %107 = vector.extract_strided_slice %47 {offsets = [0, 0, 0], sizes = [1, 2, 128], strides = [1, 1, 1]} : vector<4x2x128xf32> to vector<1x2x128xf32>
    %108 = vector.shape_cast %107 : vector<1x2x128xf32> to vector<2x128xf32>
    %109 = vector.broadcast %1 : f32 to vector<2x128xf32>
    %110 = arith.mulf %109, %108 : vector<2x128xf32>
    %111 = vector.broadcast %106 : f32 to vector<2x128xf32>
    %112 = arith.addf %111, %110 : vector<2x128xf32>
    %113 = vector.extract_strided_slice %47 {offsets = [1, 0, 0], sizes = [1, 2, 128], strides = [1, 1, 1]} : vector<4x2x128xf32> to vector<1x2x128xf32>
    %114 = vector.shape_cast %113 : vector<1x2x128xf32> to vector<2x128xf32>
    %115 = vector.broadcast %5 : f32 to vector<2x128xf32>
    %116 = arith.mulf %115, %114 : vector<2x128xf32>
    %117 = arith.addf %112, %116 : vector<2x128xf32>
    %118 = vector.extract_strided_slice %47 {offsets = [2, 0, 0], sizes = [1, 2, 128], strides = [1, 1, 1]} : vector<4x2x128xf32> to vector<1x2x128xf32>
    %119 = vector.shape_cast %118 : vector<1x2x128xf32> to vector<2x128xf32>
    %120 = vector.broadcast %9 : f32 to vector<2x128xf32>
    %121 = arith.mulf %120, %119 : vector<2x128xf32>
    %122 = arith.addf %117, %121 : vector<2x128xf32>
    %123 = vector.extract_strided_slice %47 {offsets = [3, 0, 0], sizes = [1, 2, 128], strides = [1, 1, 1]} : vector<4x2x128xf32> to vector<1x2x128xf32>
    %124 = vector.shape_cast %123 : vector<1x2x128xf32> to vector<2x128xf32>
    %125 = vector.broadcast %13 : f32 to vector<2x128xf32>
    %126 = arith.mulf %125, %124 : vector<2x128xf32>
    %127 = arith.addf %122, %126 : vector<2x128xf32>
    %128 = vector.extract_strided_slice %52 {offsets = [0, 0, 0], sizes = [1, 2, 128], strides = [1, 1, 1]} : vector<4x2x128xf32> to vector<1x2x128xf32>
    %129 = vector.shape_cast %128 : vector<1x2x128xf32> to vector<2x128xf32>
    %130 = vector.broadcast %17 : f32 to vector<2x128xf32>
    %131 = arith.mulf %130, %129 : vector<2x128xf32>
    %132 = arith.addf %127, %131 : vector<2x128xf32>
    %133 = vector.extract_strided_slice %52 {offsets = [1, 0, 0], sizes = [1, 2, 128], strides = [1, 1, 1]} : vector<4x2x128xf32> to vector<1x2x128xf32>
    %134 = vector.shape_cast %133 : vector<1x2x128xf32> to vector<2x128xf32>
    %135 = vector.broadcast %21 : f32 to vector<2x128xf32>
    %136 = arith.mulf %135, %134 : vector<2x128xf32>
    %137 = arith.addf %132, %136 : vector<2x128xf32>
    %138 = vector.extract_strided_slice %52 {offsets = [2, 0, 0], sizes = [1, 2, 128], strides = [1, 1, 1]} : vector<4x2x128xf32> to vector<1x2x128xf32>
    %139 = vector.shape_cast %138 : vector<1x2x128xf32> to vector<2x128xf32>
    %140 = vector.broadcast %25 : f32 to vector<2x128xf32>
    %141 = arith.mulf %140, %139 : vector<2x128xf32>
    %142 = arith.addf %137, %141 : vector<2x128xf32>
    %143 = vector.extract_strided_slice %52 {offsets = [3, 0, 0], sizes = [1, 2, 128], strides = [1, 1, 1]} : vector<4x2x128xf32> to vector<1x2x128xf32>
    %144 = vector.shape_cast %143 : vector<1x2x128xf32> to vector<2x128xf32>
    %145 = vector.broadcast %29 : f32 to vector<2x128xf32>
    %146 = arith.mulf %145, %144 : vector<2x128xf32>
    %147 = arith.addf %142, %146 : vector<2x128xf32>
    %148 = vector.extract_strided_slice %45 {offsets = [1, 0, 0], sizes = [1, 2, 128], strides = [1, 1, 1]} : vector<4x2x128xf32> to vector<1x2x128xf32>
    %149 = vector.shape_cast %148 : vector<1x2x128xf32> to vector<2x128xf32>
    %150 = arith.subf %149, %147 : vector<2x128xf32>
    %151 = math.absf %150 : vector<2x128xf32>
    %152 = arith.addf %102, %151 : vector<2x128xf32>
    %c2_i32_33 = arith.constant 2 : i32
    %153 = arith.addi %35, %c2_i32_33 : i32
    %c2_i32_34 = arith.constant 2 : i32
    %154 = arith.addi %153, %c2_i32_34 : i32
    %155 = arith.index_cast %154 : i32 to index
    %156 = memref.load %arg2[%155] : memref<12xf32, #tpu.memory_space<smem>>
    %157 = vector.extract_strided_slice %47 {offsets = [0, 0, 0], sizes = [1, 2, 128], strides = [1, 1, 1]} : vector<4x2x128xf32> to vector<1x2x128xf32>
    %158 = vector.shape_cast %157 : vector<1x2x128xf32> to vector<2x128xf32>
    %159 = vector.broadcast %2 : f32 to vector<2x128xf32>
    %160 = arith.mulf %159, %158 : vector<2x128xf32>
    %161 = vector.broadcast %156 : f32 to vector<2x128xf32>
    %162 = arith.addf %161, %160 : vector<2x128xf32>
    %163 = vector.extract_strided_slice %47 {offsets = [1, 0, 0], sizes = [1, 2, 128], strides = [1, 1, 1]} : vector<4x2x128xf32> to vector<1x2x128xf32>
    %164 = vector.shape_cast %163 : vector<1x2x128xf32> to vector<2x128xf32>
    %165 = vector.broadcast %6 : f32 to vector<2x128xf32>
    %166 = arith.mulf %165, %164 : vector<2x128xf32>
    %167 = arith.addf %162, %166 : vector<2x128xf32>
    %168 = vector.extract_strided_slice %47 {offsets = [2, 0, 0], sizes = [1, 2, 128], strides = [1, 1, 1]} : vector<4x2x128xf32> to vector<1x2x128xf32>
    %169 = vector.shape_cast %168 : vector<1x2x128xf32> to vector<2x128xf32>
    %170 = vector.broadcast %10 : f32 to vector<2x128xf32>
    %171 = arith.mulf %170, %169 : vector<2x128xf32>
    %172 = arith.addf %167, %171 : vector<2x128xf32>
    %173 = vector.extract_strided_slice %47 {offsets = [3, 0, 0], sizes = [1, 2, 128], strides = [1, 1, 1]} : vector<4x2x128xf32> to vector<1x2x128xf32>
    %174 = vector.shape_cast %173 : vector<1x2x128xf32> to vector<2x128xf32>
    %175 = vector.broadcast %14 : f32 to vector<2x128xf32>
    %176 = arith.mulf %175, %174 : vector<2x128xf32>
    %177 = arith.addf %172, %176 : vector<2x128xf32>
    %178 = vector.extract_strided_slice %52 {offsets = [0, 0, 0], sizes = [1, 2, 128], strides = [1, 1, 1]} : vector<4x2x128xf32> to vector<1x2x128xf32>
    %179 = vector.shape_cast %178 : vector<1x2x128xf32> to vector<2x128xf32>
    %180 = vector.broadcast %18 : f32 to vector<2x128xf32>
    %181 = arith.mulf %180, %179 : vector<2x128xf32>
    %182 = arith.addf %177, %181 : vector<2x128xf32>
    %183 = vector.extract_strided_slice %52 {offsets = [1, 0, 0], sizes = [1, 2, 128], strides = [1, 1, 1]} : vector<4x2x128xf32> to vector<1x2x128xf32>
    %184 = vector.shape_cast %183 : vector<1x2x128xf32> to vector<2x128xf32>
    %185 = vector.broadcast %22 : f32 to vector<2x128xf32>
    %186 = arith.mulf %185, %184 : vector<2x128xf32>
    %187 = arith.addf %182, %186 : vector<2x128xf32>
    %188 = vector.extract_strided_slice %52 {offsets = [2, 0, 0], sizes = [1, 2, 128], strides = [1, 1, 1]} : vector<4x2x128xf32> to vector<1x2x128xf32>
    %189 = vector.shape_cast %188 : vector<1x2x128xf32> to vector<2x128xf32>
    %190 = vector.broadcast %26 : f32 to vector<2x128xf32>
    %191 = arith.mulf %190, %189 : vector<2x128xf32>
    %192 = arith.addf %187, %191 : vector<2x128xf32>
    %193 = vector.extract_strided_slice %52 {offsets = [3, 0, 0], sizes = [1, 2, 128], strides = [1, 1, 1]} : vector<4x2x128xf32> to vector<1x2x128xf32>
    %194 = vector.shape_cast %193 : vector<1x2x128xf32> to vector<2x128xf32>
    %195 = vector.broadcast %30 : f32 to vector<2x128xf32>
    %196 = arith.mulf %195, %194 : vector<2x128xf32>
    %197 = arith.addf %192, %196 : vector<2x128xf32>
    %198 = vector.extract_strided_slice %45 {offsets = [2, 0, 0], sizes = [1, 2, 128], strides = [1, 1, 1]} : vector<4x2x128xf32> to vector<1x2x128xf32>
    %199 = vector.shape_cast %198 : vector<1x2x128xf32> to vector<2x128xf32>
    %200 = arith.subf %199, %197 : vector<2x128xf32>
    %201 = math.absf %200 : vector<2x128xf32>
    %202 = arith.addf %152, %201 : vector<2x128xf32>
    %c2_i32_35 = arith.constant 2 : i32
    %203 = arith.addi %35, %c2_i32_35 : i32
    %c3_i32 = arith.constant 3 : i32
    %204 = arith.addi %203, %c3_i32 : i32
    %205 = arith.index_cast %204 : i32 to index
    %206 = memref.load %arg2[%205] : memref<12xf32, #tpu.memory_space<smem>>
    %207 = vector.extract_strided_slice %47 {offsets = [0, 0, 0], sizes = [1, 2, 128], strides = [1, 1, 1]} : vector<4x2x128xf32> to vector<1x2x128xf32>
    %208 = vector.shape_cast %207 : vector<1x2x128xf32> to vector<2x128xf32>
    %209 = vector.broadcast %3 : f32 to vector<2x128xf32>
    %210 = arith.mulf %209, %208 : vector<2x128xf32>
    %211 = vector.broadcast %206 : f32 to vector<2x128xf32>
    %212 = arith.addf %211, %210 : vector<2x128xf32>
    %213 = vector.extract_strided_slice %47 {offsets = [1, 0, 0], sizes = [1, 2, 128], strides = [1, 1, 1]} : vector<4x2x128xf32> to vector<1x2x128xf32>
    %214 = vector.shape_cast %213 : vector<1x2x128xf32> to vector<2x128xf32>
    %215 = vector.broadcast %7 : f32 to vector<2x128xf32>
    %216 = arith.mulf %215, %214 : vector<2x128xf32>
    %217 = arith.addf %212, %216 : vector<2x128xf32>
    %218 = vector.extract_strided_slice %47 {offsets = [2, 0, 0], sizes = [1, 2, 128], strides = [1, 1, 1]} : vector<4x2x128xf32> to vector<1x2x128xf32>
    %219 = vector.shape_cast %218 : vector<1x2x128xf32> to vector<2x128xf32>
    %220 = vector.broadcast %11 : f32 to vector<2x128xf32>
    %221 = arith.mulf %220, %219 : vector<2x128xf32>
    %222 = arith.addf %217, %221 : vector<2x128xf32>
    %223 = vector.extract_strided_slice %47 {offsets = [3, 0, 0], sizes = [1, 2, 128], strides = [1, 1, 1]} : vector<4x2x128xf32> to vector<1x2x128xf32>
    %224 = vector.shape_cast %223 : vector<1x2x128xf32> to vector<2x128xf32>
    %225 = vector.broadcast %15 : f32 to vector<2x128xf32>
    %226 = arith.mulf %225, %224 : vector<2x128xf32>
    %227 = arith.addf %222, %226 : vector<2x128xf32>
    %228 = vector.extract_strided_slice %52 {offsets = [0, 0, 0], sizes = [1, 2, 128], strides = [1, 1, 1]} : vector<4x2x128xf32> to vector<1x2x128xf32>
    %229 = vector.shape_cast %228 : vector<1x2x128xf32> to vector<2x128xf32>
    %230 = vector.broadcast %19 : f32 to vector<2x128xf32>
    %231 = arith.mulf %230, %229 : vector<2x128xf32>
    %232 = arith.addf %227, %231 : vector<2x128xf32>
    %233 = vector.extract_strided_slice %52 {offsets = [1, 0, 0], sizes = [1, 2, 128], strides = [1, 1, 1]} : vector<4x2x128xf32> to vector<1x2x128xf32>
    %234 = vector.shape_cast %233 : vector<1x2x128xf32> to vector<2x128xf32>
    %235 = vector.broadcast %23 : f32 to vector<2x128xf32>
    %236 = arith.mulf %235, %234 : vector<2x128xf32>
    %237 = arith.addf %232, %236 : vector<2x128xf32>
    %238 = vector.extract_strided_slice %52 {offsets = [2, 0, 0], sizes = [1, 2, 128], strides = [1, 1, 1]} : vector<4x2x128xf32> to vector<1x2x128xf32>
    %239 = vector.shape_cast %238 : vector<1x2x128xf32> to vector<2x128xf32>
    %240 = vector.broadcast %27 : f32 to vector<2x128xf32>
    %241 = arith.mulf %240, %239 : vector<2x128xf32>
    %242 = arith.addf %237, %241 : vector<2x128xf32>
    %243 = vector.extract_strided_slice %52 {offsets = [3, 0, 0], sizes = [1, 2, 128], strides = [1, 1, 1]} : vector<4x2x128xf32> to vector<1x2x128xf32>
    %244 = vector.shape_cast %243 : vector<1x2x128xf32> to vector<2x128xf32>
    %245 = vector.broadcast %31 : f32 to vector<2x128xf32>
    %246 = arith.mulf %245, %244 : vector<2x128xf32>
    %247 = arith.addf %242, %246 : vector<2x128xf32>
    %248 = vector.extract_strided_slice %45 {offsets = [3, 0, 0], sizes = [1, 2, 128], strides = [1, 1, 1]} : vector<4x2x128xf32> to vector<1x2x128xf32>
    %249 = vector.shape_cast %248 : vector<1x2x128xf32> to vector<2x128xf32>
    %250 = arith.subf %249, %247 : vector<2x128xf32>
    %251 = math.absf %250 : vector<2x128xf32>
    %252 = arith.addf %202, %251 : vector<2x128xf32>
    %253 = vector.shape_cast %252 : vector<2x128xf32> to vector<1x1x2x128xf32>
    %c0_36 = arith.constant 0 : index
    %c0_37 = arith.constant 0 : index
    %c0_38 = arith.constant 0 : index
    %c0_39 = arith.constant 0 : index
    %254 = vector.load %arg8[%c0_36, %c0_37, %c0_38, %c0_39] : memref<1x1x2x128xf32, #tpu.memory_space<vmem>>, vector<1x1x2x128xf32>
    tpu.vector_store %arg8[%c0_36, %c0_37, %c0_38, %c0_39], %253 {strides = array<i32>} : memref<1x1x2x128xf32, #tpu.memory_space<vmem>>, vector<1x1x2x128xf32>,
    return
  }
  func.func @transform_0(%arg0: i32, %arg1: i32) -> i32 {
    %c0_i32 = arith.constant 0 : i32
    %c0_i32_0 = arith.constant 0 : i32
    return %c0_i32 : i32
  }
  func.func @transform_1(%arg0: i32, %arg1: i32) -> i32 {
    %c0_i32 = arith.constant 0 : i32
    %c0_i32_0 = arith.constant 0 : i32
    return %c0_i32 : i32
  }
  func.func @transform_2(%arg0: i32, %arg1: i32) -> i32 {
    %c0_i32 = arith.constant 0 : i32
    %c0_i32_0 = arith.constant 0 : i32
    return %c0_i32 : i32
  }
  func.func @transform_3(%arg0: i32, %arg1: i32) -> (i32, i32, i32, i32) {
    %c0_i32 = arith.constant 0 : i32
    %c0_i32_0 = arith.constant 0 : i32
    %c0_i32_1 = arith.constant 0 : i32
    return %arg0, %c0_i32, %arg1, %c0_i32_0 : i32, i32, i32, i32
  }
  func.func @transform_4(%arg0: i32, %arg1: i32) -> (i32, i32, i32, i32) {
    %c0_i32 = arith.constant 0 : i32
    %c0_i32_0 = arith.constant 0 : i32
    %c0_i32_1 = arith.constant 0 : i32
    return %arg0, %c0_i32, %arg1, %c0_i32_0 : i32, i32, i32, i32
  }
  func.func @transform_5(%arg0: i32, %arg1: i32) -> (i32, i32, i32, i32) {
    %c0_i32 = arith.constant 0 : i32
    %c0_i32_0 = arith.constant 0 : i32
    %c0_i32_1 = arith.constant 0 : i32
    return %arg0, %c0_i32, %arg1, %c0_i32_0 : i32, i32, i32, i32
  }
  func.func @transform_6(%arg0: i32, %arg1: i32) -> (i32, i32, i32, i32) {
    %c0_i32 = arith.constant 0 : i32
    %c0_i32_0 = arith.constant 0 : i32
    %c0_i32_1 = arith.constant 0 : i32
    return %arg0, %arg1, %c0_i32, %c0_i32_0 : i32, i32, i32, i32
  }
}

</mosaic_0001>

<llo_original>
// kernel: tpu_custom_call.1
$region0: #{tpu_custom_call.1}
  #allocation0 [shape = 'u32[]', space=smem, size = 0x4, offset = 0x4, fixed_abs, tag = 'smem constant byte address 0x4 - core index']
  #allocation1 [shape = 'u32[144,128]{1,0:T(1,128)}', space=vmem, size = 0x12000, scoped, tag = 'internal scratch']
  %s0 = inlined_call_operand.hbm [shape: f32[12], index: 0, kind: input, shape index: {}]
  %s1 = inlined_call_operand.vmem [shape: f32[16], index: 1, kind: input, shape index: {}]
  %s2 = inlined_call_operand.vmem [shape: f32[16], index: 2, kind: input, shape index: {}]
  %s3 = inlined_call_operand.hbm [shape: f32[2,4,2,128], index: 3, kind: input, shape index: {}]
  %s4 = inlined_call_operand.hbm [shape: f32[2,4,2,128], index: 4, kind: input, shape index: {}]
  %s5 = inlined_call_operand.vmem [shape: f32[2,4,2,128], index: 5, kind: input, shape index: {}]
  %s6 = inlined_call_operand.hbm [shape: f32[2,1,2,128], index: 6, kind: output, shape index: {}]
  %s7 = sld [smem:[#allocation0]]
  $region77: #{tpu_custom_call.1} parent=0
    _
  %s9 = ssub.s32 1, %s7
  %s10 = scalar_select 0, %s9, %s7
  $region1: #{tpu_custom_call.1} parent=0
    #allocation2 [shape = 'u8[512]{0}', space=smem, size = 0x200, scoped, tag = 'input window, operand 0, single buffered']
    #allocation3 [shape = 's32[2]{0}', space=sflag, size = 0x8, scoped, tag = 'scoped memory for tpu_custom_call.1']
    #allocation4 [shape = 's32[2]{0}', space=sflag, size = 0x8, scoped, tag = 'scoped memory for tpu_custom_call.1']
    #allocation5 [shape = 's32[2]{0}', space=sflag, size = 0x8, scoped, tag = 'scoped memory for tpu_custom_call.1']
    #allocation6 [shape = 's32[2]{0}', space=sflag, size = 0x8, scoped, tag = 'scoped memory for tpu_custom_call.1']
    #allocation7 [shape = 'u8[512]{0}', space=smem, size = 0x200, scoped, tag = 'input window, operand 1, single buffered']
    #allocation8 [shape = 'u8[512]{0}', space=smem, size = 0x200, scoped, tag = 'input window, operand 2, single buffered']
    #allocation9 [shape = 's32[1]{0}', space=sflag, size = 0x4, scoped, tag = 'scoped memory for tpu_custom_call.1']
    #allocation10 [shape = 'u8[8192]{0}', space=vmem, size = 0x2000, scoped, tag = 'input window, operand 3']
    #allocation11 [shape = 'u8[8192]{0}', space=vmem, size = 0x2000, scoped, tag = 'input window, operand 4']
    #allocation12 [shape = 's32[2]{0}', space=sflag, size = 0x8, scoped, tag = 'scoped memory for tpu_custom_call.1']
    #allocation13 [shape = 'u8[2048]{0}', space=vmem, size = 0x800, scoped, tag = 'output window, operand 0']
    %11 = vsyncpa [#allocation5], 0
    %12 = vsyncpa [#allocation6], 0
    %13 = vsyncpa [#allocation9], 0
    %14 = vsyncpa [#allocation3], 0
    %s15 = scalar_lea.sflag [#allocation3], 1
    %16 = vsyncpa %s15, 0
    %17 = vsyncpa [#allocation12], 0
    %s18 = scalar_lea.sflag [#allocation12], 1
    %19 = vsyncpa %s18, 0
    %20 = vsyncpa [#allocation4], 0
    %s21 = scalar_lea.sflag [#allocation4], 1
    %22 = vsyncpa %s21, 0
    loop: start=0, step=1, limit=4
    $region2: #{tpu_custom_call.1} parent=1 // loop_pre_header
      _
    $region3: #{tpu_custom_call.1} parent=1 // loop_header
      %s24 = sphi 0, %s28
      %p25 = scmp.ge.s32.totalorder %s24, 4
      %s31 = sphi 0, %s43
      %s32 = sphi 0, %s39
      %s33 = sphi 0, %s31
      %s34 = sphi 0, %s32
      %s35 = sphi 0, %s33
      %s36 = sphi 0, %s34
      %s44 = sphi 0, %s44
      %s46 = sphi 0, %s44
      %s47 = sphi 0, %s46
      %s61 = sphi 0, %s47
      %s65 = sphi 0, %s65
      %s67 = sphi 0, %s65
      %s68 = sphi 0, %s67
      %s82 = sphi 0, %s68
      %s86 = sphi 0, %s86
      %s88 = sphi 0, %s86
      %s89 = sphi 0, %s88
      %s103 = sphi 0, %s89
      %s111 = sphi 0, %s113
      %s114 = sphi 0, %s111
      %s115 = sphi 0, %s114
      %s131 = sphi 0, %s115
      %s139 = sphi 0, %s141
      %s142 = sphi 0, %s139
      %s143 = sphi 0, %s142
      %s159 = sphi 0, %s143
      %s167 = sphi 0, %s169
      %s170 = sphi 0, %s167
      %s171 = sphi 0, %s170
      %s187 = sphi 0, %s171
      %s195 = sphi 0, %s197
      %s198 = sphi 0, %s195
      %s199 = sphi 0, %s198
      %s215 = sphi 0, %s199
    $region4: #{tpu_custom_call.1} parent=1 // loop_header_branch
      %27 = sbr.rel (%p25) target = $region8
    $region5: #{tpu_custom_call.1} parent=1 // loop_body
      %s29 = ssub.s32 %s24, 1
      %s30 = ssub.s32 %s24, 2
      %s37 = sadd.s32 1, %s32
      %p38 = scmp.ge.s32.totalorder %s37, 1
      %s39 = scalar_select %p38, 0, %s37
      %s40 = sadd.s32 1, %s31
      %s41 = scalar_select %p38, %s40, %s31
      %p42 = scmp.ge.s32.totalorder %s41, 2
      %s43 = scalar_select %p42, 0, %s41
      %s45 = sadd.s32 %s44, 1
      %p48 = scmp.eq.s32.totalorder %s24, 1
      %p49 = scmp.ne.s32.totalorder %s44, %s46
      %p50 = scmp.eq.s32.totalorder %s24, 0
      %p51 = por %p49, %p50
      %p52 = scmp.ne.s32.totalorder %s44, %s46
      %p53 = scmp.eq.s32.totalorder %s29, 1
      %p54 = por %p52, %p53
      %p55 = scmp.ne.s32.totalorder %s46, %s47
      %p56 = scmp.eq.s32.totalorder %s29, 0
      %p57 = por %p55, %p56
      %p58 = scmp.ne.s32.totalorder %s46, %s47
      %p59 = scmp.eq.s32.totalorder %s30, 1
      %p60 = por %p58, %p59
      %p62 = scmp.ne.s32.totalorder %s47, %s61
      %p63 = scmp.eq.s32.totalorder %s30, 0
      %p64 = por %p62, %p63
      %s66 = sadd.s32 %s65, 1
      %p69 = scmp.eq.s32.totalorder %s24, 1
      %p70 = scmp.ne.s32.totalorder %s65, %s67
      %p71 = scmp.eq.s32.totalorder %s24, 0
      %p72 = por %p70, %p71
      %p73 = scmp.ne.s32.totalorder %s65, %s67
      %p74 = scmp.eq.s32.totalorder %s29, 1
      %p75 = por %p73, %p74
      %p76 = scmp.ne.s32.totalorder %s67, %s68
      %p77 = scmp.eq.s32.totalorder %s29, 0
      %p78 = por %p76, %p77
      %p79 = scmp.ne.s32.totalorder %s67, %s68
      %p80 = scmp.eq.s32.totalorder %s30, 1
      %p81 = por %p79, %p80
      %p83 = scmp.ne.s32.totalorder %s68, %s82
      %p84 = scmp.eq.s32.totalorder %s30, 0
      %p85 = por %p83, %p84
      %s87 = sadd.s32 %s86, 1
      %p90 = scmp.eq.s32.totalorder %s24, 1
      %p91 = scmp.ne.s32.totalorder %s86, %s88
      %p92 = scmp.eq.s32.totalorder %s24, 0
      %p93 = por %p91, %p92
      %p94 = scmp.ne.s32.totalorder %s86, %s88
      %p95 = scmp.eq.s32.totalorder %s29, 1
      %p96 = por %p94, %p95
      %p97 = scmp.ne.s32.totalorder %s88, %s89
      %p98 = scmp.eq.s32.totalorder %s29, 0
      %p99 = por %p97, %p98
      %p100 = scmp.ne.s32.totalorder %s88, %s89
      %p101 = scmp.eq.s32.totalorder %s30, 1
      %p102 = por %p100, %p101
      %p104 = scmp.ne.s32.totalorder %s89, %s103
      %p105 = scmp.eq.s32.totalorder %s30, 0
      %p106 = por %p104, %p105
      %s107 = ssub.s32 %s31, %s43
      %s108 = ssub.s32 %s32, %s39
      %s109 = sor.u32 %s107, %s108
      %p110 = scmp.eq.s32.totalorder %s109, 0
      %s112 = sadd.s32 %s111, 1
      %s113 = scalar_select %p110, %s111, %s112
      %p116 = pneg %p110
      %p117 = scmp.eq.s32.totalorder %s24, 1
      %p118 = por %p116, %p117
      %p119 = scmp.ne.s32.totalorder %s111, %s114
      %p120 = scmp.eq.s32.totalorder %s24, 0
      %p121 = por %p119, %p120
      %p122 = scmp.ne.s32.totalorder %s111, %s114
      %p123 = scmp.eq.s32.totalorder %s29, 1
      %p124 = por %p122, %p123
      %p125 = scmp.ne.s32.totalorder %s114, %s115
      %p126 = scmp.eq.s32.totalorder %s29, 0
      %p127 = por %p125, %p126
      %p128 = scmp.ne.s32.totalorder %s114, %s115
      %p129 = scmp.eq.s32.totalorder %s30, 1
      %p130 = por %p128, %p129
      %p132 = scmp.ne.s32.totalorder %s115, %s131
      %p133 = scmp.eq.s32.totalorder %s30, 0
      %p134 = por %p132, %p133
      %s135 = ssub.s32 %s31, %s43
      %s136 = ssub.s32 %s32, %s39
      %s137 = sor.u32 %s135, %s136
      %p138 = scmp.eq.s32.totalorder %s137, 0
      %s140 = sadd.s32 %s139, 1
      %s141 = scalar_select %p138, %s139, %s140
      %p144 = pneg %p138
      %p145 = scmp.eq.s32.totalorder %s24, 1
      %p146 = por %p144, %p145
      %p147 = scmp.ne.s32.totalorder %s139, %s142
      %p148 = scmp.eq.s32.totalorder %s24, 0
      %p149 = por %p147, %p148
      %p150 = scmp.ne.s32.totalorder %s139, %s142
      %p151 = scmp.eq.s32.totalorder %s29, 1
      %p152 = por %p150, %p151
      %p153 = scmp.ne.s32.totalorder %s142, %s143
      %p154 = scmp.eq.s32.totalorder %s29, 0
      %p155 = por %p153, %p154
      %p156 = scmp.ne.s32.totalorder %s142, %s143
      %p157 = scmp.eq.s32.totalorder %s30, 1
      %p158 = por %p156, %p157
      %p160 = scmp.ne.s32.totalorder %s143, %s159
      %p161 = scmp.eq.s32.totalorder %s30, 0
      %p162 = por %p160, %p161
      %s163 = ssub.s32 %s31, %s43
      %s164 = ssub.s32 %s32, %s39
      %s165 = sor.u32 %s163, %s164
      %p166 = scmp.eq.s32.totalorder %s165, 0
      %s168 = sadd.s32 %s167, 1
      %s169 = scalar_select %p166, %s167, %s168
      %p172 = pneg %p166
      %p173 = scmp.eq.s32.totalorder %s24, 1
      %p174 = por %p172, %p173
      %p175 = scmp.ne.s32.totalorder %s167, %s170
      %p176 = scmp.eq.s32.totalorder %s24, 0
      %p177 = por %p175, %p176
      %p178 = scmp.ne.s32.totalorder %s167, %s170
      %p179 = scmp.eq.s32.totalorder %s29, 1
      %p180 = por %p178, %p179
      %p181 = scmp.ne.s32.totalorder %s170, %s171
      %p182 = scmp.eq.s32.totalorder %s29, 0
      %p183 = por %p181, %p182
      %p184 = scmp.ne.s32.totalorder %s170, %s171
      %p185 = scmp.eq.s32.totalorder %s30, 1
      %p186 = por %p184, %p185
      %p188 = scmp.ne.s32.totalorder %s171, %s187
      %p189 = scmp.eq.s32.totalorder %s30, 0
      %p190 = por %p188, %p189
      %s191 = ssub.s32 %s31, %s43
      %s192 = ssub.s32 %s32, %s39
      %s193 = sor.u32 %s191, %s192
      %p194 = scmp.eq.s32.totalorder %s193, 0
      %s196 = sadd.s32 %s195, 1
      %s197 = scalar_select %p194, %s195, %s196
      %p200 = pneg %p194
      %p201 = scmp.eq.s32.totalorder %s24, 1
      %p202 = por %p200, %p201
      %p203 = scmp.ne.s32.totalorder %s195, %s198
      %p204 = scmp.eq.s32.totalorder %s24, 0
      %p205 = por %p203, %p204
      %p206 = scmp.ne.s32.totalorder %s195, %s198
      %p207 = scmp.eq.s32.totalorder %s29, 1
      %p208 = por %p206, %p207
      %p209 = scmp.ne.s32.totalorder %s198, %s199
      %p210 = scmp.eq.s32.totalorder %s29, 0
      %p211 = por %p209, %p210
      %p212 = scmp.ne.s32.totalorder %s198, %s199
      %p213 = scmp.eq.s32.totalorder %s30, 1
      %p214 = por %p212, %p213
      %p216 = scmp.ne.s32.totalorder %s199, %s215
      %p217 = scmp.eq.s32.totalorder %s30, 0
      %p218 = por %p216, %p217
      %p219 = scmp.le.s32.totalorder 1, %s24
      %p220 = scmp.lt.s32.totalorder %s24, 3
      %p221 = pnand %p219, %p220
      %p222 = pneg %p221
      // Predicated region
      $region9: #{tpu_custom_call.1} parent=5 // pred_check
        _
      $region10: #{tpu_custom_call.1} parent=5 // pred_check_branch
        %224 = sbr.rel (%p221) target = $region12
      $region11: #{tpu_custom_call.1} parent=5 // pred_region
        %s225 = ssub.s32 %s24, 1
        // Predicated region
        $region13: #{tpu_custom_call.1} parent=11 // pred_check
          %p226 = pneg %p57
        $region14: #{tpu_custom_call.1} parent=11 // pred_check_branch
          %228 = sbr.rel (%p226) target = $region16
        $region15: #{tpu_custom_call.1} parent=11 // pred_region
          %s230 = ssub.s32 16, 16
          %231 = vsyncadd [#allocation5], %s230
          %234 = dma.hbm_to_smem %s0, 16, [#allocation2], [#allocation5]
        $region16: #{tpu_custom_call.1} parent=11 // pred_fallthru
          _
        // Predicated region
        $region17: #{tpu_custom_call.1} parent=11 // pred_check
          %p235 = pneg %p78
        $region18: #{tpu_custom_call.1} parent=11 // pred_check_branch
          %237 = sbr.rel (%p235) target = $region20
        $region19: #{tpu_custom_call.1} parent=11 // pred_region
          %s239 = ssub.s32 16, 16
          %240 = vsyncadd [#allocation6], %s239
          %s242 = sshll.u32 %s1, 4
          %s243 = int_to_ptr.vmem [resolvable:$true] %s242
          %245 = dma.vmem_to_smem %s243, 16, [#allocation7], [#allocation6]
        $region20: #{tpu_custom_call.1} parent=11 // pred_fallthru
          _
        // Predicated region
        $region21: #{tpu_custom_call.1} parent=11 // pred_check
          %p246 = pneg %p99
        $region22: #{tpu_custom_call.1} parent=11 // pred_check_branch
          %248 = sbr.rel (%p246) target = $region24
        $region23: #{tpu_custom_call.1} parent=11 // pred_region
          %s250 = ssub.s32 16, 16
          %251 = vsyncadd [#allocation9], %s250
          %s253 = sshll.u32 %s2, 4
          %s254 = int_to_ptr.vmem [resolvable:$true] %s253
          %256 = dma.vmem_to_smem %s254, 16, [#allocation8], [#allocation9]
        $region24: #{tpu_custom_call.1} parent=11 // pred_fallthru
          _
      $region12: #{tpu_custom_call.1} parent=5 // pred_fallthru
        _
      %p257 = scmp.lt.s32.totalorder %s24, 2
      // Predicated region
      $region25: #{tpu_custom_call.1} parent=5 // pred_check
        %p258 = pneg %p257
      $region26: #{tpu_custom_call.1} parent=5 // pred_check_branch
        %260 = sbr.rel (%p258) target = $region28
      $region27: #{tpu_custom_call.1} parent=5 // pred_region
        // Predicated region
        $region29: #{tpu_custom_call.1} parent=27 // pred_check
          %p261 = pneg %p121
        $region30: #{tpu_custom_call.1} parent=27 // pred_check_branch
          %263 = sbr.rel (%p261) target = $region32
        $region31: #{tpu_custom_call.1} parent=27 // pred_region
          %s264 = sand.u32 %s111, 1
          %s265 = scalar_lea.sflag [#allocation3], %s264
          %s266 = sand.u32 %s111, 1
          %s267 = smul.addr %s266, 8
          %s268 = scalar_lea.vmem [#allocation10], %s267
          %s270 = ssub.s32 128, 128
          %271 = vsyncadd %s265, %s270
          %s272 = smul.addr %s31, 4
          %s273 = sadd.s32 %s32, %s272
          %s274 = smul.addr %s273, 32
          %s275 = scalar_lea.hbm %s3, %s274
          %s276 = sshll.u32 %s268, 4
          %s277 = int_to_ptr.vmem [resolvable:$true] %s276
          %282 = dma.hbm_to_vmem [thread:$0]  %s275, 128, %s277, %s265, 32, 32, 2
        $region32: #{tpu_custom_call.1} parent=27 // pred_fallthru
          _
        // Predicated region
        $region33: #{tpu_custom_call.1} parent=27 // pred_check
          %p283 = pneg %p149
        $region34: #{tpu_custom_call.1} parent=27 // pred_check_branch
          %285 = sbr.rel (%p283) target = $region36
        $region35: #{tpu_custom_call.1} parent=27 // pred_region
          %s286 = sand.u32 %s139, 1
          %s287 = scalar_lea.sflag [#allocation12], %s286
          %s288 = sand.u32 %s139, 1
          %s289 = smul.addr %s288, 8
          %s290 = scalar_lea.vmem [#allocation11], %s289
          %s292 = ssub.s32 128, 128
          %293 = vsyncadd %s287, %s292
          %s294 = smul.addr %s31, 4
          %s295 = sadd.s32 %s32, %s294
          %s296 = smul.addr %s295, 32
          %s297 = scalar_lea.hbm %s4, %s296
          %s298 = sshll.u32 %s290, 4
          %s299 = int_to_ptr.vmem [resolvable:$true] %s298
          %304 = dma.hbm_to_vmem [thread:$0]  %s297, 128, %s299, %s287, 32, 32, 2
        $region36: #{tpu_custom_call.1} parent=27 // pred_fallthru
          _
        // Predicated region
        $region37: #{tpu_custom_call.1} parent=27 // pred_check
          %p305 = pneg %p177
        $region38: #{tpu_custom_call.1} parent=27 // pred_check_branch
          %307 = sbr.rel (%p305) target = $region40
        $region39: #{tpu_custom_call.1} parent=27 // pred_region
          %p308 = scmp.lt.s32.totalorder %s31, 1
          %s309 = scalar_select %p308, %s31, 1
          %p310 = scmp.lt.s32.totalorder %s32, 0
          %s311 = scalar_select %p310, %s32, 0
          %s312 = smul.addr %s309, 4
          %s313 = sadd.s32 %s311, %s312
          %s314 = smul.addr %s313, 2
          %s315 = scalar_lea.vmem %s5, %s314
        $region40: #{tpu_custom_call.1} parent=27 // pred_fallthru
          _
      $region28: #{tpu_custom_call.1} parent=5 // pred_fallthru
        _
      %p316 = scmp.le.s32.totalorder 1, %s24
      %p317 = scmp.lt.s32.totalorder %s24, 3
      %p318 = pnand %p316, %p317
      %p319 = pneg %p318
      // Predicated region
      $region41: #{tpu_custom_call.1} parent=5 // pred_check
        _
      $region42: #{tpu_custom_call.1} parent=5 // pred_check_branch
        %321 = sbr.rel (%p318) target = $region44
      $region43: #{tpu_custom_call.1} parent=5 // pred_region
        %s322 = ssub.s32 %s24, 1
        // Predicated region
        $region45: #{tpu_custom_call.1} parent=43 // pred_check
          %p323 = pneg %p57
        $region46: #{tpu_custom_call.1} parent=43 // pred_check_branch
          %325 = sbr.rel (%p323) target = $region48
        $region47: #{tpu_custom_call.1} parent=43 // pred_region
          %326 = dma.done [#allocation5], 16
        $region48: #{tpu_custom_call.1} parent=43 // pred_fallthru
          _
        // Predicated region
        $region49: #{tpu_custom_call.1} parent=43 // pred_check
          %p327 = pneg %p78
        $region50: #{tpu_custom_call.1} parent=43 // pred_check_branch
          %329 = sbr.rel (%p327) target = $region52
        $region51: #{tpu_custom_call.1} parent=43 // pred_region
          %330 = dma.done [#allocation6], 16
        $region52: #{tpu_custom_call.1} parent=43 // pred_fallthru
          _
        // Predicated region
        $region53: #{tpu_custom_call.1} parent=43 // pred_check
          %p331 = pneg %p99
        $region54: #{tpu_custom_call.1} parent=43 // pred_check_branch
          %333 = sbr.rel (%p331) target = $region56
        $region55: #{tpu_custom_call.1} parent=43 // pred_region
          %334 = dma.done [#allocation9], 16
        $region56: #{tpu_custom_call.1} parent=43 // pred_fallthru
          _
        %s335 = sand.u32 %s114, 1
        %s336 = scalar_lea.sflag [#allocation3], %s335
        %s337 = sand.u32 %s114, 1
        %s338 = smul.addr %s337, 8
        %s339 = scalar_lea.vmem [#allocation10], %s338
        // Predicated region
        $region57: #{tpu_custom_call.1} parent=43 // pred_check
          %p340 = pneg %p127
        $region58: #{tpu_custom_call.1} parent=43 // pred_check_branch
          %342 = sbr.rel (%p340) target = $region60
        $region59: #{tpu_custom_call.1} parent=43 // pred_region
          %343 = dma.done %s336, 128
        $region60: #{tpu_custom_call.1} parent=43 // pred_fallthru
          _
        %s344 = sand.u32 %s142, 1
        %s345 = scalar_lea.sflag [#allocation12], %s344
        %s346 = sand.u32 %s142, 1
        %s347 = smul.addr %s346, 8
        %s348 = scalar_lea.vmem [#allocation11], %s347
        // Predicated region
        $region61: #{tpu_custom_call.1} parent=43 // pred_check
          %p349 = pneg %p155
        $region62: #{tpu_custom_call.1} parent=43 // pred_check_branch
          %351 = sbr.rel (%p349) target = $region64
        $region63: #{tpu_custom_call.1} parent=43 // pred_region
          %352 = dma.done %s345, 128
        $region64: #{tpu_custom_call.1} parent=43 // pred_fallthru
          _
        %353 = sfence
        %p354 = pneg %p57
        %p355 = pneg %p54
        %p356 = pneg %p78
        %p357 = pneg %p75
        %p358 = pneg %p99
        %p359 = pneg %p96
        %s360 = sand.u32 %s114, 1
        %s361 = scalar_lea.sflag [#allocation3], %s360
        %s362 = sand.u32 %s114, 1
        %s363 = smul.addr %s362, 8
        %s364 = scalar_lea.vmem [#allocation10], %s363
        %p365 = pneg %p127
        %p366 = pneg %p124
        %s367 = sand.u32 %s142, 1
        %s368 = scalar_lea.sflag [#allocation12], %s367
        %s369 = sand.u32 %s142, 1
        %s370 = smul.addr %s369, 8
        %s371 = scalar_lea.vmem [#allocation11], %s370
        %p372 = pneg %p155
        %p373 = pneg %p152
        %p374 = scmp.lt.s32.totalorder %s33, 1
        %s375 = scalar_select %p374, %s33, 1
        %p376 = scmp.lt.s32.totalorder %s34, 0
        %s377 = scalar_select %p376, %s34, 0
        %s378 = smul.addr %s375, 4
        %s379 = sadd.s32 %s377, %s378
        %s380 = smul.addr %s379, 2
        %s381 = scalar_lea.vmem %s5, %s380
        %p382 = pneg %p183
        %p383 = pneg %p180
        %p384 = pneg %p211
        %p385 = pneg %p208
        %s386 = sand.u32 %s198, 1
        %s387 = scalar_lea.sflag [#allocation4], %s386
        %s388 = sand.u32 %s198, 1
        %s389 = smul.addr %s388, 2
        %s390 = scalar_lea.vmem [#allocation13], %s389
        %p391 = scmp.lt.s32.totalorder %s33, 1
        %s392 = scalar_select %p391, %s33, 1
        %p393 = scmp.lt.s32.totalorder %s34, 0
        %s394 = scalar_select %p393, %s34, 0
        %s395 = smul.addr %s392, 4
        %s396 = sadd.s32 %s394, %s395
        %s397 = smul.addr %s396, 2
        %s398 = scalar_lea.vmem %s5, %s397
        %s399 = sld [smem:[#allocation7]]
        %s400 = sld [smem:[#allocation7 + $0x1]]
        %s401 = sld [smem:[#allocation7 + $0x2]]
        %s402 = sld [smem:[#allocation7 + $0x3]]
        %s403 = sld [smem:[#allocation7 + $0x4]]
        %s404 = sld [smem:[#allocation7 + $0x5]]
        %s405 = sld [smem:[#allocation7 + $0x6]]
        %s406 = sld [smem:[#allocation7 + $0x7]]
        %s407 = sld [smem:[#allocation7 + $0x8]]
        %s408 = sld [smem:[#allocation7 + $0x9]]
        %s409 = sld [smem:[#allocation7 + $0xa]]
        %s410 = sld [smem:[#allocation7 + $0xb]]
        %s411 = sld [smem:[#allocation7 + $0xc]]
        %s412 = sld [smem:[#allocation7 + $0xd]]
        %s413 = sld [smem:[#allocation7 + $0xe]]
        %s414 = sld [smem:[#allocation7 + $0xf]]
        %s415 = sld [smem:[#allocation8]]
        %s416 = sld [smem:[#allocation8 + $0x1]]
        %s417 = sld [smem:[#allocation8 + $0x2]]
        %s418 = sld [smem:[#allocation8 + $0x3]]
        %s419 = sld [smem:[#allocation8 + $0x4]]
        %s420 = sld [smem:[#allocation8 + $0x5]]
        %s421 = sld [smem:[#allocation8 + $0x6]]
        %s422 = sld [smem:[#allocation8 + $0x7]]
        %s423 = sld [smem:[#allocation8 + $0x8]]
        %s424 = sld [smem:[#allocation8 + $0x9]]
        %s425 = sld [smem:[#allocation8 + $0xa]]
        %s426 = sld [smem:[#allocation8 + $0xb]]
        %s427 = sld [smem:[#allocation8 + $0xc]]
        %s428 = sld [smem:[#allocation8 + $0xd]]
        %s429 = sld [smem:[#allocation8 + $0xe]]
        %s430 = sld [smem:[#allocation8 + $0xf]]
        %s431 = smul.u32 %s33, 6
        %s432 = sld [smem:[#allocation2 + %s431]]
        %s433 = sadd.s32 %s431, 1
        %s434 = sld [smem:[#allocation2 + %s433]]
        %v435 = vld [vmem:[%s339] sm:$0x3]
        %v436 = vld [vmem:[%s339 + $0x2] sm:$0x3]
        %v437 = vld [vmem:[%s339 + $0x4] sm:$0x3]
        %v438 = vld [vmem:[%s339 + $0x6] sm:$0x3]
        %v439 = vld [vmem:[%s398] sm:$0x3]
        %v440 = vld [vmem:[%s398 + $0x2] sm:$0x3]
        %v441 = vld [vmem:[%s398 + $0x4] sm:$0x3]
        %v442 = vld [vmem:[%s398 + $0x6] sm:$0x3]
        %v443 = vld [vmem:[%s348] sm:$0x3]
        %v444 = vld [vmem:[%s348 + $0x2] sm:$0x3]
        %v445 = vld [vmem:[%s348 + $0x4] sm:$0x3]
        %v446 = vld [vmem:[%s348 + $0x6] sm:$0x3]
        %v447 = vstv %s432
        %v448 = vmul.f32 %v447, %v435
        %v449 = vmul.f32 %v447, %v436
        %v450 = vmul.f32 %v447, %v437
        %v451 = vmul.f32 %v447, %v438
        %v452 = vstv %s434
        %v453 = vmul.f32 %v452, %v439
        %v454 = vmul.f32 %v452, %v440
        %v455 = vmul.f32 %v452, %v441
        %v456 = vmul.f32 %v452, %v442
        %v457 = vadd.f32 %v448, %v453
        %v458 = vadd.f32 %v449, %v454
        %v459 = vadd.f32 %v450, %v455
        %v460 = vadd.f32 %v451, %v456
        %s461 = sadd.s32 %s431, 2
        %s462 = sld [smem:[#allocation2 + %s461]]
        %v463 = vstv %s399
        %v464 = vmul.f32 %v463, %v443
        %v465 = vstv %s462
        %v466 = vadd.f32 %v465, %v464
        %v467 = vstv %s403
        %v468 = vmul.f32 %v467, %v444
        %v469 = vadd.f32 %v466, %v468
        %v470 = vstv %s407
        %v471 = vmul.f32 %v470, %v445
        %v472 = vadd.f32 %v469, %v471
        %v473 = vstv %s411
        %v474 = vmul.f32 %v473, %v446
        %v475 = vadd.f32 %v472, %v474
        %v476 = vstv %s415
        %v477 = vmul.f32 %v476, %v457
        %v478 = vadd.f32 %v475, %v477
        %v479 = vstv %s419
        %v480 = vmul.f32 %v479, %v458
        %v481 = vadd.f32 %v478, %v480
        %v482 = vstv %s423
        %v483 = vmul.f32 %v482, %v459
        %v484 = vadd.f32 %v481, %v483
        %v485 = vstv %s427
        %v486 = vmul.f32 %v485, %v460
        %v487 = vadd.f32 %v484, %v486
        %v488 = vsub.f32 %v439, %v487
        %v489 = vand.u32 2147483647, %v488
        %v490 = vadd.f32 %v489, 0.0
        %s491 = sadd.s32 %s431, 3
        %s492 = sld [smem:[#allocation2 + %s491]]
        %v493 = vstv %s400
        %v494 = vmul.f32 %v493, %v443
        %v495 = vstv %s492
        %v496 = vadd.f32 %v495, %v494
        %v497 = vstv %s404
        %v498 = vmul.f32 %v497, %v444
        %v499 = vadd.f32 %v496, %v498
        %v500 = vstv %s408
        %v501 = vmul.f32 %v500, %v445
        %v502 = vadd.f32 %v499, %v501
        %v503 = vstv %s412
        %v504 = vmul.f32 %v503, %v446
        %v505 = vadd.f32 %v502, %v504
        %v506 = vstv %s416
        %v507 = vmul.f32 %v506, %v457
        %v508 = vadd.f32 %v505, %v507
        %v509 = vstv %s420
        %v510 = vmul.f32 %v509, %v458
        %v511 = vadd.f32 %v508, %v510
        %v512 = vstv %s424
        %v513 = vmul.f32 %v512, %v459
        %v514 = vadd.f32 %v511, %v513
        %v515 = vstv %s428
        %v516 = vmul.f32 %v515, %v460
        %v517 = vadd.f32 %v514, %v516
        %v518 = vsub.f32 %v440, %v517
        %v519 = vand.u32 2147483647, %v518
        %v520 = vadd.f32 %v490, %v519
        %s521 = sadd.s32 %s431, 4
        %s522 = sld [smem:[#allocation2 + %s521]]
        %v523 = vstv %s401
        %v524 = vmul.f32 %v523, %v443
        %v525 = vstv %s522
        %v526 = vadd.f32 %v525, %v524
        %v527 = vstv %s405
        %v528 = vmul.f32 %v527, %v444
        %v529 = vadd.f32 %v526, %v528
        %v530 = vstv %s409
        %v531 = vmul.f32 %v530, %v445
        %v532 = vadd.f32 %v529, %v531
        %v533 = vstv %s413
        %v534 = vmul.f32 %v533, %v446
        %v535 = vadd.f32 %v532, %v534
        %v536 = vstv %s417
        %v537 = vmul.f32 %v536, %v457
        %v538 = vadd.f32 %v535, %v537
        %v539 = vstv %s421
        %v540 = vmul.f32 %v539, %v458
        %v541 = vadd.f32 %v538, %v540
        %v542 = vstv %s425
        %v543 = vmul.f32 %v542, %v459
        %v544 = vadd.f32 %v541, %v543
        %v545 = vstv %s429
        %v546 = vmul.f32 %v545, %v460
        %v547 = vadd.f32 %v544, %v546
        %v548 = vsub.f32 %v441, %v547
        %v549 = vand.u32 2147483647, %v548
        %v550 = vadd.f32 %v520, %v549
        %s551 = sadd.s32 %s431, 5
        %s552 = sld [smem:[#allocation2 + %s551]]
        %v553 = vstv %s402
        %v554 = vmul.f32 %v553, %v443
        %v555 = vstv %s552
        %v556 = vadd.f32 %v555, %v554
        %v557 = vstv %s406
        %v558 = vmul.f32 %v557, %v444
        %v559 = vadd.f32 %v556, %v558
        %v560 = vstv %s410
        %v561 = vmul.f32 %v560, %v445
        %v562 = vadd.f32 %v559, %v561
        %v563 = vstv %s414
        %v564 = vmul.f32 %v563, %v446
        %v565 = vadd.f32 %v562, %v564
        %v566 = vstv %s418
        %v567 = vmul.f32 %v566, %v457
        %v568 = vadd.f32 %v565, %v567
        %v569 = vstv %s422
        %v570 = vmul.f32 %v569, %v458
        %v571 = vadd.f32 %v568, %v570
        %v572 = vstv %s426
        %v573 = vmul.f32 %v572, %v459
        %v574 = vadd.f32 %v571, %v573
        %v575 = vstv %s430
        %v576 = vmul.f32 %v575, %v460
        %v577 = vadd.f32 %v574, %v576
        %v578 = vsub.f32 %v442, %v577
        %v579 = vand.u32 2147483647, %v578
        %v580 = vadd.f32 %v550, %v579
        %581 = vst [vmem:[%s390] sm:$0x3] %v580
        %s582 = sand.u32 %s198, 1
        %s583 = scalar_lea.sflag [#allocation4], %s582
        %s584 = sand.u32 %s198, 1
        %s585 = smul.addr %s584, 2
        %s586 = scalar_lea.vmem [#allocation13], %s585
        // Predicated region
        $region65: #{tpu_custom_call.1} parent=43 // pred_check
          %p587 = pneg %p208
        $region66: #{tpu_custom_call.1} parent=43 // pred_check_branch
          %589 = sbr.rel (%p587) target = $region68
        $region67: #{tpu_custom_call.1} parent=43 // pred_region
          %s591 = ssub.s32 32, 32
          %592 = vsyncadd %s583, %s591
          %s593 = sadd.s32 %s34, %s33
          %s594 = smul.addr %s593, 32
          %s595 = scalar_lea.hbm %s6, %s594
          %s597 = sshll.u32 %s586, 4
          %s598 = int_to_ptr.vmem [resolvable:$true] %s597
          %600 = dma.vmem_to_hbm [thread:$0]  %s598, 32, %s595, %s583
        $region68: #{tpu_custom_call.1} parent=43 // pred_fallthru
          _
      $region44: #{tpu_custom_call.1} parent=5 // pred_fallthru
        _
      %p601 = scmp.le.s32.totalorder 2, %s24
      // Predicated region
      $region69: #{tpu_custom_call.1} parent=5 // pred_check
        %p602 = pneg %p601
      $region70: #{tpu_custom_call.1} parent=5 // pred_check_branch
        %604 = sbr.rel (%p602) target = $region72
      $region71: #{tpu_custom_call.1} parent=5 // pred_region
        %s605 = ssub.s32 %s24, 2
        // Predicated region
        $region73: #{tpu_custom_call.1} parent=71 // pred_check
          %p606 = pneg %p214
        $region74: #{tpu_custom_call.1} parent=71 // pred_check_branch
          %608 = sbr.rel (%p606) target = $region76
        $region75: #{tpu_custom_call.1} parent=71 // pred_region
          %s609 = sand.u32 %s199, 1
          %s610 = scalar_lea.sflag [#allocation4], %s609
          %s611 = sand.u32 %s199, 1
          %s612 = smul.addr %s611, 2
          %s613 = scalar_lea.vmem [#allocation13], %s612
          %614 = dma.done %s610, 32
        $region76: #{tpu_custom_call.1} parent=71 // pred_fallthru
          _
      $region72: #{tpu_custom_call.1} parent=5 // pred_fallthru
        _
    $region6: #{tpu_custom_call.1} parent=1 // loop_footer
      %s28 = sadd.s32 1, %s24
    $region7: #{tpu_custom_call.1} parent=1 // loop_footer_branch
      %23 = sbr.rel target = $region3
    $region8: #{tpu_custom_call.1} parent=1 // loop_exit
      _
    %615 = vsyncpa [#allocation3], 1
    %s616 = scalar_lea.sflag [#allocation3], 1
    %617 = vsyncpa %s616, 1
    %618 = vsyncpa [#allocation12], 1
    %s619 = scalar_lea.sflag [#allocation12], 1
    %620 = vsyncpa %s619, 1
    %621 = vsyncpa [#allocation4], 1
    %s622 = scalar_lea.sflag [#allocation4], 1
    %623 = vsyncpa %s622, 1
    %624 = vsyncpa [#allocation5], 1
    %s625 = scalar_lea.sflag [#allocation5], 1
    %626 = vsyncpa %s625, 1
    %627 = vsyncpa [#allocation6], 1
    %s628 = scalar_lea.sflag [#allocation6], 1
    %629 = vsyncpa %s628, 1
    %630 = vsyncpa [#allocation9], 1

</llo_original>
